<compile_context>
chip_gen: v6e
topology: v6e:2x2x1
jax: 0.10.0
libtpu: 0.0.40
codegen_flags: <defaults>
</compile_context>

<pallas_src>
import functools

import jax
import jax.numpy as jnp
from jax.experimental import pallas as pl
from jax.experimental.pallas import tpu as pltpu


_LANE = 128          # TPU vreg lane width: keep last dims lane-dense
_NEG_BIG = -1e9      # bias for padded vocab columns (drops out of log-sum-exp)


def _round_up(x, m):
    return ((x + m - 1) // m) * m


def _pad2(a, rows, cols, value=0.0):
    pr, pc = rows - a.shape[0], cols - a.shape[1]
    if pr == 0 and pc == 0:
        return a
    return jnp.pad(a, ((0, pr), (0, pc)), constant_values=value)


def _head_kernel(x_ref, w1_ref, b1_ref, w2_ref, b2_ref, o_ref, *, apply_log_softmax):
    # One row tile of activations; weights are VMEM-resident across the grid.
    # bf16 operands feed the MXU; accumulation + elementwise math stay in f32.
    h = jnp.tanh(
        jnp.dot(x_ref[...], w1_ref[...], preferred_element_type=jnp.float32)
        + b1_ref[...]
    )
    # TODO(synk): dropout is identity in eval mode; training-mode dropout
    # (pltpu.prng_random_bits mask) intentionally not applied here.
    logits = (
        jnp.dot(h.astype(jnp.bfloat16), w2_ref[...],
                preferred_element_type=jnp.float32)
        + b2_ref[...]
    )
    if apply_log_softmax:
        m = jnp.max(logits, axis=-1, keepdims=True)
        z = logits - m
        lse = jnp.log(jnp.sum(jnp.exp(z), axis=-1, keepdims=True))
        o_ref[...] = (z - lse).astype(o_ref.dtype)
    else:
        o_ref[...] = logits.astype(o_ref.dtype)


def _pick_row_tile(m_rows, dp, hp, vp, budget_bytes=24 * 1024 * 1024):
    """Largest row tile whose 2x-buffered tiles + resident weights fit the budget."""
    weights = dp * hp * 2 + hp * vp * 2 + (hp + vp) * 4
    for tm in (1024, 512, 256, 128, 64, 32, 16):
        tiles = 2 * (tm * dp * 2 + tm * vp * 4)       # bf16 input + f32 output tiles
        interm = 3 * tm * max(hp, vp) * 4             # h / logits / temporaries (f32)
        if weights + tiles + interm <= budget_bytes:
            return min(tm, _round_up(m_rows, 16))
    return 16


def mlp_head(x, w1, b1, w2, b2, *, apply_log_softmax=True, out_dtype=jnp.float32):
    """log_softmax(tanh(x @ w1 + b1) @ w2 + b2) (log_softmax optional).

    x: (..., Din); w1: (Din, H); b1: (H,); w2: (H, V); b2: (V,).
    Weights are the PyTorch Linear weights pre-transposed to (in, out).
    """
    *lead, d_in = x.shape
    h_dim, v_dim = w2.shape
    assert w1.shape == (d_in, h_dim)
    m_rows = 1
    for d in lead:
        m_rows *= int(d)

    dp = _round_up(d_in, _LANE)
    hp = _round_up(h_dim, _LANE)
    vp = _round_up(v_dim, _LANE)
    tm = _pick_row_tile(m_rows, dp, hp, vp)
    mp = _round_up(m_rows, tm)

    # Lane-dense, bf16 MXU operands; biases stay f32.
    x2 = _pad2(x.reshape(m_rows, d_in), mp, dp).astype(jnp.bfloat16)
    w1p = _pad2(w1, dp, hp).astype(jnp.bfloat16)
    b1p = _pad2(b1.reshape(1, h_dim), 1, hp).astype(jnp.float32)
    w2p = _pad2(w2, hp, vp).astype(jnp.bfloat16)
    pad_bias = _NEG_BIG if apply_log_softmax else 0.0
    b2p = _pad2(b2.reshape(1, v_dim), 1, vp, value=pad_bias).astype(jnp.float32)

    grid = (mp // tm,)

    flops = 2 * mp * dp * hp + 2 * mp * hp * vp
    transcendentals = mp * hp + (mp * vp + mp if apply_log_softmax else 0)
    out_itemsize = jnp.dtype(out_dtype).itemsize
    bytes_accessed = (x2.size * 2 + w1p.size * 2 + w2p.size * 2
                      + (b1p.size + b2p.size) * 4 + mp * vp * out_itemsize)

    weights_bytes = w1p.size * 2 + w2p.size * 2 + (b1p.size + b2p.size) * 4
    tile_bytes = 2 * (tm * dp * 2 + tm * vp * 4) + 3 * tm * max(hp, vp) * 4
    vmem_limit = int(min(max(2 * (weights_bytes + tile_bytes), 32 * 1024 * 1024),
                         64 * 1024 * 1024))

    out = pl.pallas_call(
        functools.partial(_head_kernel, apply_log_softmax=apply_log_softmax),
        out_shape=jax.ShapeDtypeStruct((mp, vp), out_dtype),
        grid_spec=pltpu.PrefetchScalarGridSpec(
            num_scalar_prefetch=0,
            grid=grid,
            in_specs=[
                pl.BlockSpec((tm, dp), lambda i: (i, 0)),   # x rows   (tiled)
                pl.BlockSpec((dp, hp), lambda i: (0, 0)),   # W1       (resident)
                pl.BlockSpec((1, hp), lambda i: (0, 0)),    # b1       (resident)
                pl.BlockSpec((hp, vp), lambda i: (0, 0)),   # W2       (resident)
                pl.BlockSpec((1, vp), lambda i: (0, 0)),    # b2       (resident)
            ],
            out_specs=pl.BlockSpec((tm, vp), lambda i: (i, 0)),
        ),
        compiler_params=pltpu.CompilerParams(
            dimension_semantics=("parallel",),   # row-parallel -> megacore sharding
            vmem_limit_bytes=vmem_limit,
        ),
        cost_estimate=pl.CostEstimate(
            flops=flops,
            transcendentals=transcendentals,
            bytes_accessed=bytes_accessed,
        ),
    )(x2, w1p, b1p, w2p, b2p)

    return out[:m_rows, :v_dim].reshape(*lead, v_dim)


def _torch_linear_init(key, fan_in, fan_out):
    """nn.Linear default init: U(-1/sqrt(fan_in), 1/sqrt(fan_in)); weight as (in, out)."""
    kw, kb = jax.random.split(key)
    bound = 1.0 / (fan_in ** 0.5)
    w = jax.random.uniform(kw, (fan_in, fan_out), jnp.float32, -bound, bound)
    b = jax.random.uniform(kb, (fan_out,), jnp.float32, -bound, bound)
    return w, b


def _ref_head(x, w1, b1, w2, b2, apply_log_softmax=True):
    """Pure-JAX reference mimicking the kernel's bf16 operands / f32 accumulation."""
    xb, w1b, w2b = (a.astype(jnp.bfloat16) for a in (x, w1, w2))
    h = jnp.tanh(jnp.dot(xb, w1b, preferred_element_type=jnp.float32) + b1)
    logits = jnp.dot(h.astype(jnp.bfloat16), w2b,
                     preferred_element_type=jnp.float32) + b2
    return jax.nn.log_softmax(logits, axis=-1) if apply_log_softmax else logits


if __name__ == "__main__":
    key = jax.random.PRNGKey(0)

    # 1) Classification-head variant at the module's d_model / n_vocab scale:
    #    batch=2, seq=8, d_model=32, n_vocab=32.
    B, S, D, V = 2, 8, 32, 32
    k0, k1, k2, key = jax.random.split(key, 4)
    x = jax.random.normal(k0, (B, S, D), jnp.float32)
    w1, b1 = _torch_linear_init(k1, D, D)
    w2, b2 = _torch_linear_init(k2, D, V)
    out = jax.block_until_ready(mlp_head(x, w1, b1, w2, b2, apply_log_softmax=True))
    ref = _ref_head(x, w1, b1, w2, b2, True)
    assert out.shape == (B, S, V)
    assert jnp.allclose(out, ref, atol=5e-3, rtol=5e-3), "head (log_softmax) mismatch"
    # loose semantic anchor vs. a pure-f32 reference
    ref32 = jax.nn.log_softmax(jnp.tanh(x @ w1 + b1) @ w2 + b2, axis=-1)
    assert float(jnp.max(jnp.abs(out - ref32))) < 0.1, "bf16 path drifted from f32 ref"

    # 2) Larger tiled run: exercises multi-step M grid + D/V lane padding.
    B2, S2, D2, V2 = 4, 384, 48, 80
    k3, k4, k5, key = jax.random.split(key, 4)
    x2 = jax.random.normal(k3, (B2, S2, D2), jnp.float32)
    w1b_, b1b_ = _torch_linear_init(k4, D2, D2)
    w2b_, b2b_ = _torch_linear_init(k5, D2, V2)
    out2 = jax.block_until_ready(mlp_head(x2, w1b_, b1b_, w2b_, b2b_,
                                          apply_log_softmax=True))
    ref2 = _ref_head(x2, w1b_, b1b_, w2b_, b2b_, True)
    assert out2.shape == (B2, S2, V2)
    assert jnp.allclose(out2, ref2, atol=5e-3, rtol=5e-3), "tiled head mismatch"

    # 3) MetaPredictorCATE.pred_fc: Linear(input_dim, hs) -> Tanh -> Linear(hs, 1).
    nb, input_dim, hs = 2, 56, 32
    k6, k7, k8, key = jax.random.split(key, 4)
    xp = jax.random.normal(k6, (nb, input_dim), jnp.float32)
    wp1, bp1 = _torch_linear_init(k7, input_dim, hs)
    wp2, bp2 = _torch_linear_init(k8, hs, 1)
    yp = jax.block_until_ready(mlp_head(xp, wp1, bp1, wp2, bp2,
                                        apply_log_softmax=False))
    refp = _ref_head(xp, wp1, bp1, wp2, bp2, False)
    assert yp.shape == (nb, 1)
    assert jnp.allclose(yp, refp, atol=5e-3, rtol=5e-3), "pred_fc mismatch"

    print("KERNEL_OK")
</pallas_src>

<mosaic_0001>
module attributes {stable_mosaic.version = 11 : i64} {
  func.func @_head_kernel(%arg0: i32, %arg1: memref<16x128xbf16, #tpu.memory_space<vmem>>, %arg2: memref<128x128xbf16, #tpu.memory_space<vmem>>, %arg3: memref<1x128xf32, #tpu.memory_space<vmem>>, %arg4: memref<128x128xbf16, #tpu.memory_space<vmem>>, %arg5: memref<1x128xf32, #tpu.memory_space<vmem>>, %arg6: memref<16x128xf32, #tpu.memory_space<vmem>>) attributes {dimension_semantics = [#tpu.dimension_semantics<parallel>], iteration_bounds = array<i64: 1>, scalar_prefetch = 0 : i64, scratch_operands = 0 : i64, tpu.core_type = #tpu.core_type<tc>, window_params = [{transform_indices = @transform_0, window_bounds = array<i64: 16, 128>}, {pipeline_mode = #tpu.pipeline_mode<synchronous>, transform_indices = @transform_1, window_bounds = array<i64: 128, 128>}, {pipeline_mode = #tpu.pipeline_mode<synchronous>, transform_indices = @transform_2, window_bounds = array<i64: 1, 128>}, {pipeline_mode = #tpu.pipeline_mode<synchronous>, transform_indices = @transform_3, window_bounds = array<i64: 128, 128>}, {pipeline_mode = #tpu.pipeline_mode<synchronous>, transform_indices = @transform_4, window_bounds = array<i64: 1, 128>}, {transform_indices = @transform_5, window_bounds = array<i64: 16, 128>}]} {
    %c0 = arith.constant 0 : index
    %c0_0 = arith.constant 0 : index
    %0 = vector.load %arg1[%c0, %c0_0] : memref<16x128xbf16, #tpu.memory_space<vmem>>, vector<16x128xbf16>
    %c0_1 = arith.constant 0 : index
    %c0_2 = arith.constant 0 : index
    %1 = vector.load %arg2[%c0_1, %c0_2] : memref<128x128xbf16, #tpu.memory_space<vmem>>, vector<128x128xbf16>
    %cst = arith.constant dense<0.000000e+00> : vector<16x128xf32>
    %2 = tpu.matmul %0, %1, %cst {dimension_numbers = #tpu.dot_dimension_numbers<[1], [0], [0], [1], [0, 0, 1, 1], [], []>} : vector<16x128xbf16>, vector<128x128xbf16>, vector<16x128xf32> -> vector<16x128xf32>
    %c0_3 = arith.constant 0 : index
    %c0_4 = arith.constant 0 : index
    %3 = vector.load %arg3[%c0_3, %c0_4] : memref<1x128xf32, #tpu.memory_space<vmem>>, vector<1x128xf32>
    %4 = vector.broadcast %3 : vector<1x128xf32> to vector<16x128xf32>
    %5 = arith.addf %2, %4 : vector<16x128xf32>
    %6 = math.tanh %5 : vector<16x128xf32>
    %7 = arith.truncf %6 : vector<16x128xf32> to vector<16x128xbf16>
    %c0_5 = arith.constant 0 : index
    %c0_6 = arith.constant 0 : index
    %8 = vector.load %arg4[%c0_5, %c0_6] : memref<128x128xbf16, #tpu.memory_space<vmem>>, vector<128x128xbf16>
    %cst_7 = arith.constant dense<0.000000e+00> : vector<16x128xf32>
    %9 = tpu.matmul %7, %8, %cst_7 {dimension_numbers = #tpu.dot_dimension_numbers<[1], [0], [0], [1], [0, 0, 1, 1], [], []>} : vector<16x128xbf16>, vector<128x128xbf16>, vector<16x128xf32> -> vector<16x128xf32>
    %c0_8 = arith.constant 0 : index
    %c0_9 = arith.constant 0 : index
    %10 = vector.load %arg5[%c0_8, %c0_9] : memref<1x128xf32, #tpu.memory_space<vmem>>, vector<1x128xf32>
    %11 = vector.broadcast %10 : vector<1x128xf32> to vector<16x128xf32>
    %12 = arith.addf %9, %11 : vector<16x128xf32>
    %cst_10 = arith.constant dense<0xFF800000> : vector<16xf32>
    %13 = vector.multi_reduction <maximumf>, %12, %cst_10 [1] : vector<16x128xf32> to vector<16xf32>
    %14 = vector.shape_cast %13 : vector<16xf32> to vector<16x1xf32>
    %15 = vector.broadcast %14 : vector<16x1xf32> to vector<16x128xf32>
    %16 = arith.subf %12, %15 : vector<16x128xf32>
    %17 = math.exp %16 : vector<16x128xf32>
    %cst_11 = arith.constant dense<0.000000e+00> : vector<16xf32>
    %18 = vector.multi_reduction <add>, %17, %cst_11 [1] : vector<16x128xf32> to vector<16xf32>
    %19 = vector.shape_cast %18 : vector<16xf32> to vector<16x1xf32>
    %20 = math.log %19 : vector<16x1xf32>
    %21 = vector.broadcast %20 : vector<16x1xf32> to vector<16x128xf32>
    %22 = arith.subf %16, %21 : vector<16x128xf32>
    %c0_12 = arith.constant 0 : index
    %c0_13 = arith.constant 0 : index
    %23 = vector.load %arg6[%c0_12, %c0_13] : memref<16x128xf32, #tpu.memory_space<vmem>>, vector<16x128xf32>
    tpu.vector_store %arg6[%c0_12, %c0_13], %22 {strides = array<i32>} : memref<16x128xf32, #tpu.memory_space<vmem>>, vector<16x128xf32>,
    return
  }
  func.func @transform_0(%arg0: i32) -> (i32, i32) {
    %c0_i32 = arith.constant 0 : i32
    %c0_i32_0 = arith.constant 0 : i32
    return %arg0, %c0_i32 : i32, i32
  }
  func.func @transform_1(%arg0: i32) -> (i32, i32) {
    %c0_i32 = arith.constant 0 : i32
    %c0_i32_0 = arith.constant 0 : i32
    %c0_i32_1 = arith.constant 0 : i32
    return %c0_i32, %c0_i32_0 : i32, i32
  }
  func.func @transform_2(%arg0: i32) -> (i32, i32) {
    %c0_i32 = arith.constant 0 : i32
    %c0_i32_0 = arith.constant 0 : i32
    %c0_i32_1 = arith.constant 0 : i32
    return %c0_i32, %c0_i32_0 : i32, i32
  }
  func.func @transform_3(%arg0: i32) -> (i32, i32) {
    %c0_i32 = arith.constant 0 : i32
    %c0_i32_0 = arith.constant 0 : i32
    %c0_i32_1 = arith.constant 0 : i32
    return %c0_i32, %c0_i32_0 : i32, i32
  }
  func.func @transform_4(%arg0: i32) -> (i32, i32) {
    %c0_i32 = arith.constant 0 : i32
    %c0_i32_0 = arith.constant 0 : i32
    %c0_i32_1 = arith.constant 0 : i32
    return %c0_i32, %c0_i32_0 : i32, i32
  }
  func.func @transform_5(%arg0: i32) -> (i32, i32) {
    %c0_i32 = arith.constant 0 : i32
    %c0_i32_0 = arith.constant 0 : i32
    return %arg0, %c0_i32 : i32, i32
  }
}

</mosaic_0001>

<llo_original>
// kernel: tpu_custom_call.1
$region0: #{tpu_custom_call.1}
  #allocation0 [shape = 'u32[]', space=smem, size = 0x4, offset = 0x4, fixed_abs, tag = 'smem constant byte address 0x4 - core index']
  #allocation1 [shape = 'u32[144,128]{1,0:T(1,128)}', space=vmem, size = 0x12000, scoped, tag = 'internal scratch']
  %s0 = inlined_call_operand.hbm [shape: bf16[16,128], index: 0, kind: input, shape index: {}]
  %s1 = inlined_call_operand.hbm [shape: bf16[128,128], index: 1, kind: input, shape index: {}]
  %s2 = inlined_call_operand.vmem [shape: f32[1,128], index: 2, kind: input, shape index: {}]
  %s3 = inlined_call_operand.hbm [shape: bf16[128,128], index: 3, kind: input, shape index: {}]
  %s4 = inlined_call_operand.vmem [shape: f32[1,128], index: 4, kind: input, shape index: {}]
  %s5 = inlined_call_operand.hbm [shape: f32[16,128], index: 5, kind: output, shape index: {}]
  %s6 = sld [smem:[#allocation0]]
  $region42: #{tpu_custom_call.1} parent=0
    _
  %s8 = ssub.s32 1, %s6
  %s9 = scalar_select 0, %s8, %s6
  $region1: #{tpu_custom_call.1} parent=0
    #allocation2 [shape = 'u8[4096]{0}', space=vmem, size = 0x1000, scoped, tag = 'input window, operand 0, single buffered']
    #allocation3 [shape = 's32[1]{0}', space=sflag, size = 0x4, scoped, tag = 'scoped memory for tpu_custom_call.1']
    #allocation4 [shape = 's32[1]{0}', space=sflag, size = 0x4, scoped, tag = 'scoped memory for tpu_custom_call.1']
    #allocation5 [shape = 'u8[32768]{0}', space=vmem, size = 0x8000, scoped, tag = 'input window, operand 1, single buffered']
    #allocation6 [shape = 's32[1]{0}', space=sflag, size = 0x4, scoped, tag = 'scoped memory for tpu_custom_call.1']
    #allocation7 [shape = 'u8[32768]{0}', space=vmem, size = 0x8000, scoped, tag = 'input window, operand 3, single buffered']
    #allocation8 [shape = 'u8[8192]{0}', space=vmem, size = 0x2000, scoped, tag = 'output window, operand 0, single buffered']
    %10 = vsyncpa [#allocation3], 0
    %11 = vsyncpa [#allocation6], 0
    %12 = vsyncpa [#allocation4], 0
    // Predicated region
    $region2: #{tpu_custom_call.1} parent=1 // pred_check
      _
    $region3: #{tpu_custom_call.1} parent=1 // pred_check_branch
      %14 = sbr.rel (0) target = $region5
    $region4: #{tpu_custom_call.1} parent=1 // pred_region
      %s16 = ssub.s32 128, 128
      %17 = vsyncadd [#allocation3], %s16
      %s18 = sshll.u32 [#allocation2], 4
      %s19 = int_to_ptr.vmem [resolvable:$true] %s18
      %24 = dma.hbm_to_vmem [thread:$0]  %s0, 128, %s19, [#allocation3], 64, 64, 4
    $region5: #{tpu_custom_call.1} parent=1 // pred_fallthru
      _
    // Predicated region
    $region6: #{tpu_custom_call.1} parent=1 // pred_check
      _
    $region7: #{tpu_custom_call.1} parent=1 // pred_check_branch
      %26 = sbr.rel (0) target = $region9
    $region8: #{tpu_custom_call.1} parent=1 // pred_region
      %s28 = ssub.s32 1024, 1024
      %29 = vsyncadd [#allocation6], %s28
      %s30 = sshll.u32 [#allocation5], 4
      %s31 = int_to_ptr.vmem [resolvable:$true] %s30
      %36 = dma.hbm_to_vmem [thread:$0]  %s1, 1024, %s31, [#allocation6], 64, 64, 4
    $region9: #{tpu_custom_call.1} parent=1 // pred_fallthru
      _
    // Predicated region
    $region10: #{tpu_custom_call.1} parent=1 // pred_check
      _
    $region11: #{tpu_custom_call.1} parent=1 // pred_check_branch
      %38 = sbr.rel (0) target = $region13
    $region12: #{tpu_custom_call.1} parent=1 // pred_region
      _
    $region13: #{tpu_custom_call.1} parent=1 // pred_fallthru
      _
    // Predicated region
    $region14: #{tpu_custom_call.1} parent=1 // pred_check
      _
    $region15: #{tpu_custom_call.1} parent=1 // pred_check_branch
      %40 = sbr.rel (0) target = $region17
    $region16: #{tpu_custom_call.1} parent=1 // pred_region
      %s42 = ssub.s32 1024, 1024
      %43 = vsyncadd [#allocation6], %s42
      %s44 = sshll.u32 [#allocation7], 4
      %s45 = int_to_ptr.vmem [resolvable:$true] %s44
      %50 = dma.hbm_to_vmem [thread:$0]  %s3, 1024, %s45, [#allocation6], 64, 64, 4
    $region17: #{tpu_custom_call.1} parent=1 // pred_fallthru
      _
    // Predicated region
    $region18: #{tpu_custom_call.1} parent=1 // pred_check
      _
    $region19: #{tpu_custom_call.1} parent=1 // pred_check_branch
      %52 = sbr.rel (0) target = $region21
    $region20: #{tpu_custom_call.1} parent=1 // pred_region
      _
    $region21: #{tpu_custom_call.1} parent=1 // pred_fallthru
      _
    // Predicated region
    $region22: #{tpu_custom_call.1} parent=1 // pred_check
      _
    $region23: #{tpu_custom_call.1} parent=1 // pred_check_branch
      %54 = sbr.rel (0) target = $region25
    $region24: #{tpu_custom_call.1} parent=1 // pred_region
      %55 = dma.done [#allocation3], 128
    $region25: #{tpu_custom_call.1} parent=1 // pred_fallthru
      _
    // Predicated region
    $region26: #{tpu_custom_call.1} parent=1 // pred_check
      _
    $region27: #{tpu_custom_call.1} parent=1 // pred_check_branch
      %57 = sbr.rel (0) target = $region29
    $region28: #{tpu_custom_call.1} parent=1 // pred_region
      %58 = dma.done [#allocation6], 1024
    $region29: #{tpu_custom_call.1} parent=1 // pred_fallthru
      _
    // Predicated region
    $region30: #{tpu_custom_call.1} parent=1 // pred_check
      _
    $region31: #{tpu_custom_call.1} parent=1 // pred_check_branch
      %60 = sbr.rel (0) target = $region33
    $region32: #{tpu_custom_call.1} parent=1 // pred_region
      %61 = dma.done [#allocation6], 1024
    $region33: #{tpu_custom_call.1} parent=1 // pred_fallthru
      _
    %v63 = vld [vmem:[#allocation2] sm:$0xf]
    %v64 = vld [vmem:[#allocation2 + $0x4] sm:$0xf]
    %v65 = vld [vmem:[#allocation5] sm:$0xf]
    %v66 = vld [vmem:[#allocation5 + $0x4] sm:$0xf]
    %v67 = vld [vmem:[#allocation5 + $0x8] sm:$0xf]
    %v68 = vld [vmem:[#allocation5 + $0xc] sm:$0xf]
    %v69 = vld [vmem:[#allocation5 + $0x10] sm:$0xf]
    %v70 = vld [vmem:[#allocation5 + $0x14] sm:$0xf]
    %v71 = vld [vmem:[#allocation5 + $0x18] sm:$0xf]
    %v72 = vld [vmem:[#allocation5 + $0x1c] sm:$0xf]
    %v73 = vld [vmem:[#allocation5 + $0x20] sm:$0xf]
    %v74 = vld [vmem:[#allocation5 + $0x24] sm:$0xf]
    %v75 = vld [vmem:[#allocation5 + $0x28] sm:$0xf]
    %v76 = vld [vmem:[#allocation5 + $0x2c] sm:$0xf]
    %v77 = vld [vmem:[#allocation5 + $0x30] sm:$0xf]
    %v78 = vld [vmem:[#allocation5 + $0x34] sm:$0xf]
    %v79 = vld [vmem:[#allocation5 + $0x38] sm:$0xf]
    %v80 = vld [vmem:[#allocation5 + $0x3c] sm:$0xf]
    %v81 = vld [vmem:[%s2] sm:$0x1]
    %v83 = vlaneseq
    %v84 = vshrl.u32 %v83, 7
    %v85 = vsub.s32 0, %v84
    %v86 = vrot.slane %v81, %v85
    %v90 = vunpack.c.l.b16 %v63
    %v91 = vunpack.c.l.b16 %v64
    %v92 = vpack.c.b16 %v91, %v90
    %v110 = vunpack.c.l.b16 %v65
    %v111 = vunpack.c.l.b16 %v66
    %v112 = vunpack.c.l.b16 %v67
    %v113 = vunpack.c.l.b16 %v68
    %v114 = vunpack.c.l.b16 %v69
    %v115 = vunpack.c.l.b16 %v70
    %v116 = vunpack.c.l.b16 %v71
    %v117 = vunpack.c.l.b16 %v72
    %v118 = vunpack.c.l.b16 %v73
    %v119 = vunpack.c.l.b16 %v74
    %v120 = vunpack.c.l.b16 %v75
    %v121 = vunpack.c.l.b16 %v76
    %v122 = vunpack.c.l.b16 %v77
    %v123 = vunpack.c.l.b16 %v78
    %v124 = vunpack.c.l.b16 %v79
    %v125 = vunpack.c.l.b16 %v80
    %v126 = vpack.c.b16 %v111, %v110
    %v127 = vpack.c.b16 %v113, %v112
    %v128 = vpack.c.b16 %v115, %v114
    %v129 = vpack.c.b16 %v117, %v116
    %v130 = vpack.c.b16 %v119, %v118
    %v131 = vpack.c.b16 %v121, %v120
    %v132 = vpack.c.b16 %v123, %v122
    %v133 = vpack.c.b16 %v125, %v124
    %142 = vmatprep.subr.bf16.mxu0 0
    %143 = vmatpush1.bf16.msra.mxu0 %v133
    %144 = vmatprep.subr.bf16.mxu0 0
    %145 = vmatpush1.bf16.msra.mxu0 %v132
    %146 = vmatprep.subr.bf16.mxu0 0
    %147 = vmatpush1.bf16.msra.mxu0 %v131
    %148 = vmatprep.subr.bf16.mxu0 0
    %149 = vmatpush1.bf16.msra.mxu0 %v130
    %150 = vmatprep.subr.bf16.mxu0 0
    %151 = vmatpush1.bf16.msra.mxu0 %v129
    %152 = vmatprep.subr.bf16.mxu0 0
    %153 = vmatpush1.bf16.msra.mxu0 %v128
    %154 = vmatprep.subr.bf16.mxu0 0
    %155 = vmatpush1.bf16.msra.mxu0 %v127
    %156 = vmatprep.subr.bf16.mxu0 0
    %157 = vmatpush1.bf16.msra.mxu0 %v126
    %158 = vmatprep.subr.bf16.mxu0 0
    %159 = vmatpush2.bf16.msra.mxu0 0
    %160 = vmatprep.subr.bf16.mxu0 0
    %161 = vmatpush2.bf16.msra.mxu0 0
    %162 = vmatprep.subr.bf16.mxu0 0
    %163 = vmatpush2.bf16.msra.mxu0 0
    %164 = vmatprep.subr.bf16.mxu0 0
    %165 = vmatpush2.bf16.msra.mxu0 0
    %166 = vmatprep.subr.bf16.mxu0 0
    %167 = vmatpush2.bf16.msra.mxu0 0
    %168 = vmatprep.subr.bf16.mxu0 0
    %169 = vmatpush2.bf16.msra.mxu0 0
    %170 = vmatprep.subr.bf16.mxu0 0
    %171 = vmatpush2.bf16.msra.mxu0 0
    %172 = vmatprep.subr.bf16.mxu0 0
    %173 = vmatpush2.bf16.msra.mxu0 0
    %174 = vmatprep.mubr.bf16.mxu0 0
    %175 = vmatmul.mubr.bf16.gmra.mxu0 %v92
    %v176 = vpop.f32.mrf.mxu0
    %v177 = vadd.f32 %v86, %v176
    %v178 = vpop.f32.mrf.mxu0
    %v179 = vpop.f32.mrf.mxu0
    %v180 = vadd.f32 %v86, %v179
    %v181 = vpop.f32.mrf.mxu0
    %182 = vdwg.mxu0
    %v183 = vtanh.pop %v177
    %v184 = vtanh.pop %v180
    %v185 = vpack.c.bf16 %v184, %v183
    %v186 = vld [vmem:[#allocation7] sm:$0xf]
    %v187 = vld [vmem:[#allocation7 + $0x4] sm:$0xf]
    %v188 = vld [vmem:[#allocation7 + $0x8] sm:$0xf]
    %v189 = vld [vmem:[#allocation7 + $0xc] sm:$0xf]
    %v190 = vld [vmem:[#allocation7 + $0x10] sm:$0xf]
    %v191 = vld [vmem:[#allocation7 + $0x14] sm:$0xf]
    %v192 = vld [vmem:[#allocation7 + $0x18] sm:$0xf]
    %v193 = vld [vmem:[#allocation7 + $0x1c] sm:$0xf]
    %v194 = vld [vmem:[#allocation7 + $0x20] sm:$0xf]
    %v195 = vld [vmem:[#allocation7 + $0x24] sm:$0xf]
    %v196 = vld [vmem:[#allocation7 + $0x28] sm:$0xf]
    %v197 = vld [vmem:[#allocation7 + $0x2c] sm:$0xf]
    %v198 = vld [vmem:[#allocation7 + $0x30] sm:$0xf]
    %v199 = vld [vmem:[#allocation7 + $0x34] sm:$0xf]
    %v200 = vld [vmem:[#allocation7 + $0x38] sm:$0xf]
    %v201 = vld [vmem:[#allocation7 + $0x3c] sm:$0xf]
    %v202 = vld [vmem:[%s4] sm:$0x1]
    %v204 = vlaneseq
    %v205 = vshrl.u32 %v204, 7
    %v206 = vsub.s32 0, %v205
    %v207 = vrot.slane %v202, %v206
    %v225 = vunpack.c.l.b16 %v186
    %v226 = vunpack.c.l.b16 %v187
    %v227 = vunpack.c.l.b16 %v188
    %v228 = vunpack.c.l.b16 %v189
    %v229 = vunpack.c.l.b16 %v190
    %v230 = vunpack.c.l.b16 %v191
    %v231 = vunpack.c.l.b16 %v192
    %v232 = vunpack.c.l.b16 %v193
    %v233 = vunpack.c.l.b16 %v194
    %v234 = vunpack.c.l.b16 %v195
    %v235 = vunpack.c.l.b16 %v196
    %v236 = vunpack.c.l.b16 %v197
    %v237 = vunpack.c.l.b16 %v198
    %v238 = vunpack.c.l.b16 %v199
    %v239 = vunpack.c.l.b16 %v200
    %v240 = vunpack.c.l.b16 %v201
    %v241 = vpack.c.b16 %v226, %v225
    %v242 = vpack.c.b16 %v228, %v227
    %v243 = vpack.c.b16 %v230, %v229
    %v244 = vpack.c.b16 %v232, %v231
    %v245 = vpack.c.b16 %v234, %v233
    %v246 = vpack.c.b16 %v236, %v235
    %v247 = vpack.c.b16 %v238, %v237
    %v248 = vpack.c.b16 %v240, %v239
    %257 = vmatprep.subr.bf16.mxu0 0
    %258 = vmatpush1.bf16.msra.mxu0 %v248
    %259 = vmatprep.subr.bf16.mxu0 0
    %260 = vmatpush1.bf16.msra.mxu0 %v247
    %261 = vmatprep.subr.bf16.mxu0 0
    %262 = vmatpush1.bf16.msra.mxu0 %v246
    %263 = vmatprep.subr.bf16.mxu0 0
    %264 = vmatpush1.bf16.msra.mxu0 %v245
    %265 = vmatprep.subr.bf16.mxu0 0
    %266 = vmatpush1.bf16.msra.mxu0 %v244
    %267 = vmatprep.subr.bf16.mxu0 0
    %268 = vmatpush1.bf16.msra.mxu0 %v243
    %269 = vmatprep.subr.bf16.mxu0 0
    %270 = vmatpush1.bf16.msra.mxu0 %v242
    %271 = vmatprep.subr.bf16.mxu0 0
    %272 = vmatpush1.bf16.msra.mxu0 %v241
    %273 = vmatprep.subr.bf16.mxu0 0
    %274 = vmatpush2.bf16.msra.mxu0 0
    %275 = vmatprep.subr.bf16.mxu0 0
    %276 = vmatpush2.bf16.msra.mxu0 0
    %277 = vmatprep.subr.bf16.mxu0 0
    %278 = vmatpush2.bf16.msra.mxu0 0
    %279 = vmatprep.subr.bf16.mxu0 0
    %280 = vmatpush2.bf16.msra.mxu0 0
    %281 = vmatprep.subr.bf16.mxu0 0
    %282 = vmatpush2.bf16.msra.mxu0 0
    %283 = vmatprep.subr.bf16.mxu0 0
    %284 = vmatpush2.bf16.msra.mxu0 0
    %285 = vmatprep.subr.bf16.mxu0 0
    %286 = vmatpush2.bf16.msra.mxu0 0
    %287 = vmatprep.subr.bf16.mxu0 0
    %288 = vmatpush2.bf16.msra.mxu0 0
    %289 = vmatprep.mubr.bf16.mxu0 0
    %290 = vmatmul.mubr.bf16.gmra.mxu0 %v185
    %v291 = vpop.f32.mrf.mxu0
    %v292 = vadd.f32 %v207, %v291
    %v293 = vpop.f32.mrf.mxu0
    %v294 = vpop.f32.mrf.mxu0
    %v295 = vadd.f32 %v207, %v294
    %v296 = vpop.f32.mrf.mxu0
    %297 = vdwg.mxu0
    %298 = vmax.xlane.f32.xlu0 %v292
    %v299 = vpop.xlane.xlu0 %298
    %300 = vmax.xlane.f32.xlu0 %v295
    %v301 = vpop.xlane.xlu0 %300
    %v302 = vsub.f32 %v292, %v299
    %v303 = vsub.f32 %v295, %v301
    %v304 = vmul.f32 %v302, 1.442695
    %v305 = vpow.pop %v304
    %v306 = vmul.f32 %v303, 1.442695
    %v307 = vpow.pop %v306
    %308 = vadd.xlane.f32.xlu0 %v305
    %v309 = vpop.xlane.xlu0 %308
    %310 = vadd.xlane.f32.xlu0 %v307
    %v311 = vpop.xlane.xlu0 %310
    %v312 = vlog2.pop %v309
    %v313 = vmul.f32 %v312, 0.6931472
    %v314 = vlog2.pop %v311
    %v315 = vmul.f32 %v314, 0.6931472
    %v316 = vsub.f32 %v302, %v313
    %v317 = vsub.f32 %v303, %v315
    %318 = vst [vmem:[#allocation8] sm:$0xff] %v316
    %319 = vst [vmem:[#allocation8 + $0x8] sm:$0xff] %v317
    // Predicated region
    $region34: #{tpu_custom_call.1} parent=1 // pred_check
      _
    $region35: #{tpu_custom_call.1} parent=1 // pred_check_branch
      %321 = sbr.rel (0) target = $region37
    $region36: #{tpu_custom_call.1} parent=1 // pred_region
      %s323 = ssub.s32 256, 256
      %324 = vsyncadd [#allocation4], %s323
      %s325 = sshll.u32 [#allocation8], 4
      %s326 = int_to_ptr.vmem [resolvable:$true] %s325
      %331 = dma.vmem_to_hbm [thread:$0]  %s326, 256, %s5, [#allocation4], 128, 128, 8
    $region37: #{tpu_custom_call.1} parent=1 // pred_fallthru
      _
    // Predicated region
    $region38: #{tpu_custom_call.1} parent=1 // pred_check
      _
    $region39: #{tpu_custom_call.1} parent=1 // pred_check_branch
      %333 = sbr.rel (0) target = $region41
    $region40: #{tpu_custom_call.1} parent=1 // pred_region
      %334 = dma.done [#allocation4], 256
    $region41: #{tpu_custom_call.1} parent=1 // pred_fallthru
      _
    %335 = vsyncpa [#allocation3], 1
    %336 = vsyncpa [#allocation6], 1
    %337 = vsyncpa [#allocation4], 1

</llo_original>
